<compile_context>
chip_gen: v7x
topology: tpu7x:2x2x1
jax: 0.10.0
libtpu: 0.0.40
codegen_flags: <defaults>
</compile_context>

<pallas_src>
import numpy as np
import jax
import jax.numpy as jnp
from jax.experimental import pallas as pl
from jax.experimental.pallas import tpu as pltpu

NEG_SLOPE = 0.01  # nn.LeakyReLU default negative slope


def _cftl_kernel(x_ref, wft_ref, wit_ref, y_ref):
    """One grid step = nb batch elements, vectorized (no per-element loop).

    x_ref/y_ref : (nb, CS, HWs)  channel(+sublane-fold) x spatial tile
    wft_ref     : (CS+1, 4C)     fused forward operand^T, bias folded as last row:
                                 ([cosM; sinM; W1; W2] @ Avg | [0;0;b1;b2])^T
    wit_ref     : (2C, CS)       fused inverse operand^T  [cosM/C ; -sinM/C],
                                 1/C scale and S-fold replication pre-applied
    """
    nb, cs, hws = x_ref.shape
    c = wft_ref.shape[1] // 4
    f32 = jnp.float32

    x = x_ref[...].astype(f32)                          # (nb, CS, HWs)

    # Adaptive average pool (1,1): per-(batch,row) spatial mean.  The averaging
    # over the S folded sub-rows of each channel is folded into wft_ref.
    g = jnp.mean(x, axis=2)                             # (nb, CS)
    g_aug = jnp.concatenate([g, jnp.ones((nb, 1), f32)], axis=1)   # (nb, CS+1)

    # ONE fused MXU matmul for the whole block:
    #   t = [g@cosM^T ; g@sinM^T ; g@W1^T + b1 ; g@W2^T + b2]       (nb, 4C)
    t = jnp.dot(g_aug, wft_ref[...], preferred_element_type=f32)
    re = t[:, 0:c]               # Re(F)
    nim = t[:, c:2 * c]          # -Im(F)
    s1 = t[:, 2 * c:3 * c]
    s2 = t[:, 3 * c:4 * c]
    s1 = jnp.where(s1 >= 0, s1, NEG_SLOPE * s1)         # LeakyReLU
    s2 = jnp.where(s2 >= 0, s2, NEG_SLOPE * s2)

    amp = s1 * jnp.sqrt(re * re + nim * nim)            # s1 * |F|
    ph = s2 * (-nim)                                    # s2 * Im(F)
    acs = jnp.concatenate([amp * jnp.cos(ph), amp * jnp.sin(ph)], axis=1)  # (nb, 2C)

    # ONE inverse-DFT matmul (1/C scale + S-fold replication pre-folded).
    xi = jnp.dot(acs, wit_ref[...], preferred_element_type=f32)     # (nb, CS)

    # Residual add; xi broadcast over all spatial lanes (== .repeat(1,1,H,W)).
    y_ref[...] = (x + xi[:, :, None]).astype(y_ref.dtype)


def _round_up(v, m):
    return -(-int(v) // m) * m


def _padded_tile_bytes(rows, cols, itemsize):
    """VMEM footprint of a 2-D buffer including (8,128) tile padding."""
    return _round_up(max(rows, 1), 8) * _round_up(max(cols, 1), 128) * itemsize


def _pick_fold(C, HW):
    """Pick S (spatial -> sublane fold) so each image becomes (C*S, HW/S).

    Preference order: lane-dense last dim (HW/S % 128 == 0), then at least one
    full lane tile (HW/S >= 128), then sublane-filled rows (C*S >= 8), then the
    smallest such S (keeps the folded constants small).
    """
    best_s, best_key = 1, None
    for s in range(1, min(HW, 64) + 1):
        if HW % s:
            continue
        hws, cs = HW // s, C * s
        key = (hws % 128 == 0, hws >= 128, cs >= 8, -s)
        if best_key is None or key > best_key:
            best_s, best_key = s, key
    return best_s


def cftl_forward(x, w1, b1, w2, b2, *, max_nb=None):
    """x: (N, C, H, W). w1, w2: (C, C); b1, b2: (C,)."""
    N, C, H, W = x.shape
    HW = H * W
    f32 = jnp.float32
    itemsize = np.dtype(x.dtype).itemsize

    # ---- sublane/lane fold: present each image as (C*S, HW/S).
    S = _pick_fold(C, HW)
    CS, HWs = C * S, HW // S
    xr = x.reshape(N, CS, HWs)          # contiguous reshape: free

    # ---- DFT twiddles; exact integer (k*c) mod C before scaling by 2*pi/C.
    idx = np.arange(C)
    theta = (2.0 * np.pi / C) * ((idx[:, None] * idx[None, :]) % C)
    cosM = jnp.asarray(np.cos(theta), f32)      # (C, C), symmetric
    sinM = jnp.asarray(np.sin(theta), f32)      # (C, C), symmetric

    # ---- fused constants (2 operands total), pre-transposed for the kernel.
    # Avg folds the mean over the S folded sub-rows of each channel.
    avg = jnp.asarray(np.repeat(np.eye(C), S, axis=1) / S, f32)          # (C, CS)
    fwd = jnp.concatenate([cosM, sinM, w1.astype(f32), w2.astype(f32)], axis=0) @ avg
    bias = jnp.concatenate([jnp.zeros((2 * C,), f32), b1.astype(f32),
                            b2.astype(f32)]).reshape(4 * C, 1)
    w_fwd_t = jnp.concatenate([fwd, bias], axis=1).T                    # (CS+1, 4C)
    w_inv_t = jnp.concatenate([jnp.repeat(cosM / C, S, axis=1),
                               jnp.repeat(-sinM / C, S, axis=1)], axis=0)  # (2C, CS)

    # ---- generation-aware VMEM budgeting and nb (batch elements / grid step).
    try:
        vmem_phys = int(pltpu.get_tpu_info().vmem_capacity_bytes)
    except Exception:
        vmem_phys = 64 * 1024 * 1024       # conservative (v7x-sized) fallback
    limit_cap = (vmem_phys * 3) // 4       # ~48 MiB on v7x, ~96 MiB on v5e/v6e
    if max_nb is None:
        max_nb = 32 if vmem_phys >= (100 << 20) else 16

    per_elem = _padded_tile_bytes(CS, HWs, itemsize)            # one x (or y) image
    const_bytes = (_padded_tile_bytes(CS + 1, 4 * C, 4)
                   + _padded_tile_bytes(2 * C, CS, 4))
    headroom = 4 * 1024 * 1024
    budget = limit_cap - 2 * const_bytes - headroom
    nb = max(1, min(N, max_nb, budget // (4 * per_elem)))       # in+out double-buffered
    if N >= 2:
        # Keep >= 2 grid steps so ("parallel",) can use both v7x TensorCores.
        nb = min(nb, (N + 1) // 2)
    grid = (pl.cdiv(N, nb),)   # ragged last block is fine: batch elements are
                               # independent columns; padded-row stores are masked.

    need = 4 * nb * per_elem + 2 * const_bytes + headroom
    vmem_limit = int(min(limit_cap, max(need, 32 * 1024 * 1024)))

    cost = pl.CostEstimate(
        flops=int(N * (2 * CS * HWs + 8 * C * (CS + 1) + 4 * C * CS + 12 * C)),
        transcendentals=int(3 * N * C),
        bytes_accessed=int(2 * N * CS * HWs * itemsize + const_bytes),
    )

    out = pl.pallas_call(
        _cftl_kernel,
        out_shape=jax.ShapeDtypeStruct((N, CS, HWs), x.dtype),
        grid_spec=pltpu.PrefetchScalarGridSpec(
            num_scalar_prefetch=0,
            grid=grid,
            in_specs=[
                pl.BlockSpec((nb, CS, HWs), lambda i: (i, 0, 0)),   # x block
                # Grid-invariant constants: constant index_map, so the pipeline
                # re-uses the resident copy instead of re-DMAing each step.
                pl.BlockSpec(w_fwd_t.shape, lambda i: (0, 0)),
                pl.BlockSpec(w_inv_t.shape, lambda i: (0, 0)),
            ],
            out_specs=pl.BlockSpec((nb, CS, HWs), lambda i: (i, 0, 0)),
        ),
        compiler_params=pltpu.CompilerParams(
            dimension_semantics=("parallel",),
            vmem_limit_bytes=vmem_limit,
        ),
        cost_estimate=cost,
    )(xr, w_fwd_t, w_inv_t)
    return out.reshape(N, C, H, W)


def cftl_reference(x, w1, b1, w2, b2):
    """Pure-JAX reference mirroring the PyTorch forward (uses jnp.fft)."""
    N, C, H, W = x.shape
    x_g = jnp.mean(x, axis=(2, 3))[:, :, None, None]            # (N, C, 1, 1)
    x_fft = jnp.fft.rfftn(x_g, axes=(-3, -2, -1))                # (N, C, 1, 1) complex
    A = jnp.abs(x_fft)
    P = jnp.imag(x_fft)
    s1 = jnp.einsum("oc,nchw->nohw", w1, x_g) + b1[None, :, None, None]
    s1 = jnp.where(s1 >= 0, s1, NEG_SLOPE * s1)
    s2 = jnp.einsum("oc,nchw->nohw", w2, x_g) + b2[None, :, None, None]
    s2 = jnp.where(s2 >= 0, s2, NEG_SLOPE * s2)
    A = s1 * A
    P = s2 * P
    x_fft = (A * jnp.cos(P)) + 1j * (A * jnp.sin(P))
    x_i = jnp.fft.irfftn(x_fft, s=(C, 1, 1), axes=(-3, -2, -1))
    return x + jnp.tile(x_i, (1, 1, H, W))


if __name__ == "__main__":
    key = jax.random.PRNGKey(0)
    k1, k2, k3, k4, k5 = jax.random.split(key, 5)

    N, C, H, W = 2, 4, 16, 16
    x = jax.random.normal(k1, (N, C, H, W), dtype=jnp.float32)
    # Deterministic synthetic parameters (Conv2d(dim, dim, 1) weights / biases).
    w1 = 0.5 * jax.random.normal(k2, (C, C), dtype=jnp.float32)
    b1 = 0.1 * jax.random.normal(k3, (C,), dtype=jnp.float32)
    w2 = 0.5 * jax.random.normal(k4, (C, C), dtype=jnp.float32)
    b2 = 0.1 * jax.random.normal(k5, (C,), dtype=jnp.float32)

    y = cftl_forward(x, w1, b1, w2, b2)
    jax.block_until_ready(y)

    y_ref = cftl_reference(x, w1, b1, w2, b2)
    np.testing.assert_allclose(np.asarray(y), np.asarray(y_ref), rtol=1e-4, atol=1e-4)
    print("KERNEL_OK")
</pallas_src>

<mosaic_0001>
module attributes {stable_mosaic.version = 11 : i64} {
  func.func @_cftl_kernel(%arg0: i32, %arg1: memref<1x8x128xf32, #tpu.memory_space<vmem>>, %arg2: memref<9x16xf32, #tpu.memory_space<vmem>>, %arg3: memref<8x8xf32, #tpu.memory_space<vmem>>, %arg4: memref<1x8x128xf32, #tpu.memory_space<vmem>>) attributes {dimension_semantics = [#tpu.dimension_semantics<parallel>], iteration_bounds = array<i64: 2>, scalar_prefetch = 0 : i64, scratch_operands = 0 : i64, tpu.core_type = #tpu.core_type<tc>, window_params = [{transform_indices = @transform_0, window_bounds = array<i64: 1, 8, 128>}, {pipeline_mode = #tpu.pipeline_mode<synchronous>, transform_indices = @transform_1, window_bounds = array<i64: 9, 16>}, {pipeline_mode = #tpu.pipeline_mode<synchronous>, transform_indices = @transform_2, window_bounds = array<i64: 8, 8>}, {transform_indices = @transform_3, window_bounds = array<i64: 1, 8, 128>}]} {
    %c0 = arith.constant 0 : index
    %c0_0 = arith.constant 0 : index
    %c0_1 = arith.constant 0 : index
    %0 = vector.load %arg1[%c0, %c0_0, %c0_1] : memref<1x8x128xf32, #tpu.memory_space<vmem>>, vector<1x8x128xf32>
    %cst = arith.constant dense<0.000000e+00> : vector<1x8xf32>
    %1 = vector.multi_reduction <add>, %0, %cst [2] : vector<1x8x128xf32> to vector<1x8xf32>
    %cst_2 = arith.constant 1.280000e+02 : f32
    %2 = vector.broadcast %cst_2 : f32 to vector<1x8xf32>
    %3 = arith.divf %1, %2 : vector<1x8xf32>
    %cst_3 = arith.constant 1.000000e+00 : f32
    %4 = vector.broadcast %cst_3 : f32 to vector<1x1xf32>
    %5 = tpu.concatenate %3, %4 in 1 : vector<1x8xf32>, vector<1x1xf32> -> vector<1x9xf32>
    %c0_4 = arith.constant 0 : index
    %c0_5 = arith.constant 0 : index
    %6 = vector.load %arg2[%c0_4, %c0_5] : memref<9x16xf32, #tpu.memory_space<vmem>>, vector<9x16xf32>
    %cst_6 = arith.constant dense<0.000000e+00> : vector<1x16xf32>
    %7 = tpu.matmul %5, %6, %cst_6 {dimension_numbers = #tpu.dot_dimension_numbers<[1], [0], [0], [1], [0, 0, 1, 1], [], []>} : vector<1x9xf32>, vector<9x16xf32>, vector<1x16xf32> -> vector<1x16xf32>
    %8 = vector.extract_strided_slice %7 {offsets = [0, 0], sizes = [1, 4], strides = [1, 1]} : vector<1x16xf32> to vector<1x4xf32>
    %9 = vector.extract_strided_slice %7 {offsets = [0, 4], sizes = [1, 4], strides = [1, 1]} : vector<1x16xf32> to vector<1x4xf32>
    %10 = vector.extract_strided_slice %7 {offsets = [0, 8], sizes = [1, 4], strides = [1, 1]} : vector<1x16xf32> to vector<1x4xf32>
    %11 = vector.extract_strided_slice %7 {offsets = [0, 12], sizes = [1, 4], strides = [1, 1]} : vector<1x16xf32> to vector<1x4xf32>
    %cst_7 = arith.constant 0.000000e+00 : f32
    %12 = vector.broadcast %cst_7 : f32 to vector<1x4xf32>
    %13 = arith.cmpf oge, %10, %12 : vector<1x4xf32>
    %cst_8 = arith.constant 0.00999999977 : f32
    %14 = vector.broadcast %cst_8 : f32 to vector<1x4xf32>
    %15 = arith.mulf %14, %10 : vector<1x4xf32>
    %16 = arith.select %13, %10, %15 : vector<1x4xi1>, vector<1x4xf32>
    %cst_9 = arith.constant 0.000000e+00 : f32
    %17 = vector.broadcast %cst_9 : f32 to vector<1x4xf32>
    %18 = arith.cmpf oge, %11, %17 : vector<1x4xf32>
    %cst_10 = arith.constant 0.00999999977 : f32
    %19 = vector.broadcast %cst_10 : f32 to vector<1x4xf32>
    %20 = arith.mulf %19, %11 : vector<1x4xf32>
    %21 = arith.select %18, %11, %20 : vector<1x4xi1>, vector<1x4xf32>
    %22 = arith.mulf %8, %8 : vector<1x4xf32>
    %23 = arith.mulf %9, %9 : vector<1x4xf32>
    %24 = arith.addf %22, %23 : vector<1x4xf32>
    %25 = math.sqrt %24 : vector<1x4xf32>
    %26 = arith.mulf %16, %25 : vector<1x4xf32>
    %cst_11 = arith.constant 0.000000e+00 : f32
    %27 = vector.broadcast %cst_11 : f32 to vector<1x4xf32>
    %28 = arith.subf %27, %9 : vector<1x4xf32>
    %29 = arith.mulf %21, %28 : vector<1x4xf32>
    %30 = math.cos %29 : vector<1x4xf32>
    %31 = arith.mulf %26, %30 : vector<1x4xf32>
    %32 = math.sin %29 : vector<1x4xf32>
    %33 = arith.mulf %26, %32 : vector<1x4xf32>
    %34 = tpu.concatenate %31, %33 in 1 : vector<1x4xf32>, vector<1x4xf32> -> vector<1x8xf32>
    %c0_12 = arith.constant 0 : index
    %c0_13 = arith.constant 0 : index
    %35 = vector.load %arg3[%c0_12, %c0_13] : memref<8x8xf32, #tpu.memory_space<vmem>>, vector<8x8xf32>
    %cst_14 = arith.constant dense<0.000000e+00> : vector<1x8xf32>
    %36 = tpu.matmul %34, %35, %cst_14 {dimension_numbers = #tpu.dot_dimension_numbers<[1], [0], [0], [1], [0, 0, 1, 1], [], []>} : vector<1x8xf32>, vector<8x8xf32>, vector<1x8xf32> -> vector<1x8xf32>
    %37 = vector.shape_cast %36 : vector<1x8xf32> to vector<1x8x1xf32>
    %38 = vector.broadcast %37 : vector<1x8x1xf32> to vector<1x8x128xf32>
    %39 = arith.addf %0, %38 : vector<1x8x128xf32>
    %c0_15 = arith.constant 0 : index
    %c0_16 = arith.constant 0 : index
    %c0_17 = arith.constant 0 : index
    %40 = vector.load %arg4[%c0_15, %c0_16, %c0_17] : memref<1x8x128xf32, #tpu.memory_space<vmem>>, vector<1x8x128xf32>
    tpu.vector_store %arg4[%c0_15, %c0_16, %c0_17], %39 {strides = array<i32>} : memref<1x8x128xf32, #tpu.memory_space<vmem>>, vector<1x8x128xf32>,
    return
  }
  func.func @transform_0(%arg0: i32) -> (i32, i32, i32) {
    %c0_i32 = arith.constant 0 : i32
    %c0_i32_0 = arith.constant 0 : i32
    %c0_i32_1 = arith.constant 0 : i32
    return %arg0, %c0_i32, %c0_i32_0 : i32, i32, i32
  }
  func.func @transform_1(%arg0: i32) -> (i32, i32) {
    %c0_i32 = arith.constant 0 : i32
    %c0_i32_0 = arith.constant 0 : i32
    %c0_i32_1 = arith.constant 0 : i32
    return %c0_i32, %c0_i32_0 : i32, i32
  }
  func.func @transform_2(%arg0: i32) -> (i32, i32) {
    %c0_i32 = arith.constant 0 : i32
    %c0_i32_0 = arith.constant 0 : i32
    %c0_i32_1 = arith.constant 0 : i32
    return %c0_i32, %c0_i32_0 : i32, i32
  }
  func.func @transform_3(%arg0: i32) -> (i32, i32, i32) {
    %c0_i32 = arith.constant 0 : i32
    %c0_i32_0 = arith.constant 0 : i32
    %c0_i32_1 = arith.constant 0 : i32
    return %arg0, %c0_i32, %c0_i32_0 : i32, i32, i32
  }
}

</mosaic_0001>

<llo_original>
// kernel: tpu_custom_call.1
$region0: #{tpu_custom_call.1}
  #allocation0 [shape = 'u32[]', space=smem, size = 0x4, offset = 0x4, fixed_abs, tag = 'smem constant byte address 0x4 - core index']
  #allocation1 [shape = 'u32[144,128]{1,0:T(1,128)}', space=vmem, size = 0x12000, scoped, tag = 'internal scratch']
  %s0 = inlined_call_operand.hbm [shape: f32[2,8,128], index: 0, kind: input, shape index: {}]
  %s1 = inlined_call_operand.hbm [shape: f32[9,16], index: 1, kind: input, shape index: {}]
  %s2 = inlined_call_operand.hbm [shape: f32[8,8], index: 2, kind: input, shape index: {}]
  %s3 = inlined_call_operand.hbm [shape: f32[2,8,128], index: 3, kind: output, shape index: {}]
  %s4 = sld [smem:[#allocation0]]
  $region57: #{tpu_custom_call.1} parent=0
    _
  %s6 = ssub.s32 1, %s4
  %s7 = scalar_select 0, %s6, %s4
  $region1: #{tpu_custom_call.1} parent=0
    #allocation2 [shape = 'u8[8192]{0}', space=vmem, size = 0x2000, scoped, tag = 'input window, operand 0']
    #allocation3 [shape = 's32[2]{0}', space=sflag, size = 0x8, scoped, tag = 'scoped memory for tpu_custom_call.1']
    #allocation4 [shape = 's32[2]{0}', space=sflag, size = 0x8, scoped, tag = 'scoped memory for tpu_custom_call.1']
    #allocation5 [shape = 'u8[8192]{0}', space=vmem, size = 0x2000, scoped, tag = 'input window, operand 1, single buffered']
    #allocation6 [shape = 's32[1]{0}', space=sflag, size = 0x4, scoped, tag = 'scoped memory for tpu_custom_call.1']
    #allocation7 [shape = 'u8[4096]{0}', space=vmem, size = 0x1000, scoped, tag = 'input window, operand 2, single buffered']
    #allocation8 [shape = 'u8[8192]{0}', space=vmem, size = 0x2000, scoped, tag = 'output window, operand 0']
    %8 = vsyncpa [#allocation3], 0
    %s9 = scalar_lea.sflag [#allocation3], 1
    %10 = vsyncpa %s9, 0
    %11 = vsyncpa [#allocation6], 0
    %12 = vsyncpa [#allocation4], 0
    %s13 = scalar_lea.sflag [#allocation4], 1
    %14 = vsyncpa %s13, 0
    loop: start=0, step=1, limit=4
    $region2: #{tpu_custom_call.1} parent=1 // loop_pre_header
      _
    $region3: #{tpu_custom_call.1} parent=1 // loop_header
      %s16 = sphi 0, %s20
      %p17 = scmp.ge.s32.totalorder %s16, 4
      %s26 = sphi 0, %s28
      %s29 = sphi 0, %s26
      %s30 = sphi 0, %s29
      %s46 = sphi 0, %s30
      %s50 = sphi 0, %s50
      %s52 = sphi 0, %s50
      %s53 = sphi 0, %s52
      %s67 = sphi 0, %s53
      %s71 = sphi 0, %s71
      %s73 = sphi 0, %s71
      %s74 = sphi 0, %s73
      %s88 = sphi 0, %s74
      %s94 = sphi 0, %s96
      %s97 = sphi 0, %s94
      %s98 = sphi 0, %s97
      %s114 = sphi 0, %s98
    $region4: #{tpu_custom_call.1} parent=1 // loop_header_branch
      %19 = sbr.rel (%p17) target = $region8
    $region5: #{tpu_custom_call.1} parent=1 // loop_body
      %s21 = ssub.s32 %s16, 1
      %s22 = ssub.s32 %s16, 2
      %s23 = sadd.s32 %s16, 1
      %s24 = ssub.s32 %s16, %s23
      %p25 = scmp.eq.s32.totalorder %s24, 0
      %s27 = sadd.s32 %s26, 1
      %s28 = scalar_select %p25, %s26, %s27
      %p31 = pneg %p25
      %p32 = scmp.eq.s32.totalorder %s16, 1
      %p33 = por %p31, %p32
      %p34 = scmp.ne.s32.totalorder %s26, %s29
      %p35 = scmp.eq.s32.totalorder %s16, 0
      %p36 = por %p34, %p35
      %p37 = scmp.ne.s32.totalorder %s26, %s29
      %p38 = scmp.eq.s32.totalorder %s21, 1
      %p39 = por %p37, %p38
      %p40 = scmp.ne.s32.totalorder %s29, %s30
      %p41 = scmp.eq.s32.totalorder %s21, 0
      %p42 = por %p40, %p41
      %p43 = scmp.ne.s32.totalorder %s29, %s30
      %p44 = scmp.eq.s32.totalorder %s22, 1
      %p45 = por %p43, %p44
      %p47 = scmp.ne.s32.totalorder %s30, %s46
      %p48 = scmp.eq.s32.totalorder %s22, 0
      %p49 = por %p47, %p48
      %s51 = sadd.s32 %s50, 1
      %p54 = scmp.eq.s32.totalorder %s16, 1
      %p55 = scmp.ne.s32.totalorder %s50, %s52
      %p56 = scmp.eq.s32.totalorder %s16, 0
      %p57 = por %p55, %p56
      %p58 = scmp.ne.s32.totalorder %s50, %s52
      %p59 = scmp.eq.s32.totalorder %s21, 1
      %p60 = por %p58, %p59
      %p61 = scmp.ne.s32.totalorder %s52, %s53
      %p62 = scmp.eq.s32.totalorder %s21, 0
      %p63 = por %p61, %p62
      %p64 = scmp.ne.s32.totalorder %s52, %s53
      %p65 = scmp.eq.s32.totalorder %s22, 1
      %p66 = por %p64, %p65
      %p68 = scmp.ne.s32.totalorder %s53, %s67
      %p69 = scmp.eq.s32.totalorder %s22, 0
      %p70 = por %p68, %p69
      %s72 = sadd.s32 %s71, 1
      %p75 = scmp.eq.s32.totalorder %s16, 1
      %p76 = scmp.ne.s32.totalorder %s71, %s73
      %p77 = scmp.eq.s32.totalorder %s16, 0
      %p78 = por %p76, %p77
      %p79 = scmp.ne.s32.totalorder %s71, %s73
      %p80 = scmp.eq.s32.totalorder %s21, 1
      %p81 = por %p79, %p80
      %p82 = scmp.ne.s32.totalorder %s73, %s74
      %p83 = scmp.eq.s32.totalorder %s21, 0
      %p84 = por %p82, %p83
      %p85 = scmp.ne.s32.totalorder %s73, %s74
      %p86 = scmp.eq.s32.totalorder %s22, 1
      %p87 = por %p85, %p86
      %p89 = scmp.ne.s32.totalorder %s74, %s88
      %p90 = scmp.eq.s32.totalorder %s22, 0
      %p91 = por %p89, %p90
      %s92 = ssub.s32 %s16, %s23
      %p93 = scmp.eq.s32.totalorder %s92, 0
      %s95 = sadd.s32 %s94, 1
      %s96 = scalar_select %p93, %s94, %s95
      %p99 = pneg %p93
      %p100 = scmp.eq.s32.totalorder %s16, 1
      %p101 = por %p99, %p100
      %p102 = scmp.ne.s32.totalorder %s94, %s97
      %p103 = scmp.eq.s32.totalorder %s16, 0
      %p104 = por %p102, %p103
      %p105 = scmp.ne.s32.totalorder %s94, %s97
      %p106 = scmp.eq.s32.totalorder %s21, 1
      %p107 = por %p105, %p106
      %p108 = scmp.ne.s32.totalorder %s97, %s98
      %p109 = scmp.eq.s32.totalorder %s21, 0
      %p110 = por %p108, %p109
      %p111 = scmp.ne.s32.totalorder %s97, %s98
      %p112 = scmp.eq.s32.totalorder %s22, 1
      %p113 = por %p111, %p112
      %p115 = scmp.ne.s32.totalorder %s98, %s114
      %p116 = scmp.eq.s32.totalorder %s22, 0
      %p117 = por %p115, %p116
      %p118 = scmp.le.s32.totalorder 1, %s16
      %p119 = scmp.lt.s32.totalorder %s16, 3
      %p120 = pnand %p118, %p119
      %p121 = pneg %p120
      // Predicated region
      $region9: #{tpu_custom_call.1} parent=5 // pred_check
        _
      $region10: #{tpu_custom_call.1} parent=5 // pred_check_branch
        %123 = sbr.rel (%p120) target = $region12
      $region11: #{tpu_custom_call.1} parent=5 // pred_region
        %s124 = ssub.s32 %s16, 1
        // Predicated region
        $region13: #{tpu_custom_call.1} parent=11 // pred_check
          %p125 = pneg %p63
        $region14: #{tpu_custom_call.1} parent=11 // pred_check_branch
          %127 = sbr.rel (%p125) target = $region16
        $region15: #{tpu_custom_call.1} parent=11 // pred_region
          %s129 = ssub.s32 256, 256
          %130 = vsyncadd [#allocation6], %s129
          %s131 = sshll.u32 [#allocation5], 4
          %s132 = int_to_ptr.vmem [resolvable:$true] %s131
          %137 = dma.hbm_to_vmem [thread:$0]  %s1, 256, %s132, [#allocation6], 128, 128, 8
        $region16: #{tpu_custom_call.1} parent=11 // pred_fallthru
          _
        // Predicated region
        $region17: #{tpu_custom_call.1} parent=11 // pred_check
          %p138 = pneg %p84
        $region18: #{tpu_custom_call.1} parent=11 // pred_check_branch
          %140 = sbr.rel (%p138) target = $region20
        $region19: #{tpu_custom_call.1} parent=11 // pred_region
          %s142 = ssub.s32 128, 128
          %143 = vsyncadd [#allocation6], %s142
          %s145 = sshll.u32 [#allocation7], 4
          %s146 = int_to_ptr.vmem [resolvable:$true] %s145
          %148 = dma.hbm_to_vmem [thread:$0]  %s2, 128, %s146, [#allocation6]
        $region20: #{tpu_custom_call.1} parent=11 // pred_fallthru
          _
      $region12: #{tpu_custom_call.1} parent=5 // pred_fallthru
        _
      %p149 = scmp.lt.s32.totalorder %s16, 2
      // Predicated region
      $region21: #{tpu_custom_call.1} parent=5 // pred_check
        %p150 = pneg %p149
      $region22: #{tpu_custom_call.1} parent=5 // pred_check_branch
        %152 = sbr.rel (%p150) target = $region24
      $region23: #{tpu_custom_call.1} parent=5 // pred_region
        // Predicated region
        $region25: #{tpu_custom_call.1} parent=23 // pred_check
          %p153 = pneg %p36
        $region26: #{tpu_custom_call.1} parent=23 // pred_check_branch
          %155 = sbr.rel (%p153) target = $region28
        $region27: #{tpu_custom_call.1} parent=23 // pred_region
          %s156 = sand.u32 %s26, 1
          %s157 = scalar_lea.sflag [#allocation3], %s156
          %s158 = sand.u32 %s26, 1
          %s159 = smul.addr %s158, 8
          %s160 = scalar_lea.vmem [#allocation2], %s159
          %s162 = ssub.s32 128, 128
          %163 = vsyncadd %s157, %s162
          %s164 = smul.addr %s16, 128
          %s165 = scalar_lea.hbm %s0, %s164
          %s167 = sshll.u32 %s160, 4
          %s168 = int_to_ptr.vmem [resolvable:$true] %s167
          %170 = dma.hbm_to_vmem [thread:$0]  %s165, 128, %s168, %s157
        $region28: #{tpu_custom_call.1} parent=23 // pred_fallthru
          _
      $region24: #{tpu_custom_call.1} parent=5 // pred_fallthru
        _
      %p171 = scmp.le.s32.totalorder 1, %s16
      %p172 = scmp.lt.s32.totalorder %s16, 3
      %p173 = pnand %p171, %p172
      %p174 = pneg %p173
      // Predicated region
      $region29: #{tpu_custom_call.1} parent=5 // pred_check
        _
      $region30: #{tpu_custom_call.1} parent=5 // pred_check_branch
        %176 = sbr.rel (%p173) target = $region32
      $region31: #{tpu_custom_call.1} parent=5 // pred_region
        %s177 = ssub.s32 %s16, 1
        %s178 = sand.u32 %s29, 1
        %s179 = scalar_lea.sflag [#allocation3], %s178
        %s180 = sand.u32 %s29, 1
        %s181 = smul.addr %s180, 8
        %s182 = scalar_lea.vmem [#allocation2], %s181
        // Predicated region
        $region33: #{tpu_custom_call.1} parent=31 // pred_check
          %p183 = pneg %p42
        $region34: #{tpu_custom_call.1} parent=31 // pred_check_branch
          %185 = sbr.rel (%p183) target = $region36
        $region35: #{tpu_custom_call.1} parent=31 // pred_region
          %186 = dma.done %s179, 128
        $region36: #{tpu_custom_call.1} parent=31 // pred_fallthru
          _
        // Predicated region
        $region37: #{tpu_custom_call.1} parent=31 // pred_check
          %p187 = pneg %p63
        $region38: #{tpu_custom_call.1} parent=31 // pred_check_branch
          %189 = sbr.rel (%p187) target = $region40
        $region39: #{tpu_custom_call.1} parent=31 // pred_region
          %190 = dma.done [#allocation6], 256
        $region40: #{tpu_custom_call.1} parent=31 // pred_fallthru
          _
        // Predicated region
        $region41: #{tpu_custom_call.1} parent=31 // pred_check
          %p191 = pneg %p84
        $region42: #{tpu_custom_call.1} parent=31 // pred_check_branch
          %193 = sbr.rel (%p191) target = $region44
        $region43: #{tpu_custom_call.1} parent=31 // pred_region
          %194 = dma.done [#allocation6], 128
        $region44: #{tpu_custom_call.1} parent=31 // pred_fallthru
          _
        %s195 = sand.u32 %s29, 1
        %s196 = scalar_lea.sflag [#allocation3], %s195
        %s197 = sand.u32 %s29, 1
        %s198 = smul.addr %s197, 8
        %s199 = scalar_lea.vmem [#allocation2], %s198
        %p200 = pneg %p42
        %p201 = pneg %p39
        %p202 = pneg %p63
        %p203 = pneg %p60
        %p204 = pneg %p84
        %p205 = pneg %p81
        %p206 = pneg %p110
        %p207 = pneg %p107
        %s208 = sand.u32 %s97, 1
        %s209 = scalar_lea.sflag [#allocation4], %s208
        %s210 = sand.u32 %s97, 1
        %s211 = smul.addr %s210, 8
        %s212 = scalar_lea.vmem [#allocation8], %s211
        %v213 = vld [vmem:[%s182] sm:$0xff]
        %214 = vadd.xlane.f32.xlu0 %v213
        %v215 = vpop.xlane.xlu0 %214
        %v216 = vrcp.pop 128.0
        %v217 = vmul.f32 %v215, %v216
        %v219 = vlaneseq
        %v220 = vand.u32 %v219, 127
        %v221 = vlaneseq
        %v222 = vshrl.u32 %v221, 7
        %v223 = vsub.s32 %v220, %v222
        %v224 = vrot.slane %v217, %v223
        %vm226 = vcmask 64512
        %v227 = vsel %vm226, %v224, 1.0
        %v228 = vld [vmem:[#allocation5] sm:$0xff]
        %v229 = vld [vmem:[#allocation5 + $0x8] sm:$0x1]
        %vm230 = vcmask 72704
        %v232 = vsel %vm230, %v227, 0
        %vm234 = vcmask 1040384
        %v236 = vsel %vm234, %v229, 0
        %238 = vmatprep.subr.mxu0 0.0
        %239 = vmatpush1.msra.mxu0 %v228
        %240 = vmatprep.subr.mxu0 0.0
        %241 = vmatpush1.msra.mxu0 %v236
        %242 = vmatprep.subr.mxu0 0.0
        %243 = vmatpush1.msra.mxu0 0.0
        %244 = vmatprep.subr.mxu0 0.0
        %245 = vmatpush1.msra.mxu0 0.0
        %246 = vmatprep.subr.mxu0 0.0
        %247 = vmatpush1.msra.mxu0 0.0
        %248 = vmatprep.subr.mxu0 0.0
        %249 = vmatpush1.msra.mxu0 0.0
        %250 = vmatprep.subr.mxu0 0.0
        %251 = vmatpush1.msra.mxu0 0.0
        %252 = vmatprep.subr.mxu0 0.0
        %253 = vmatpush1.msra.mxu0 0.0
        %254 = vmatprep.subr.mxu0 0.0
        %255 = vmatpush1.msra.mxu0 0.0
        %256 = vmatprep.subr.mxu0 0.0
        %257 = vmatpush1.msra.mxu0 0.0
        %258 = vmatprep.subr.mxu0 0.0
        %259 = vmatpush1.msra.mxu0 0.0
        %260 = vmatprep.subr.mxu0 0.0
        %261 = vmatpush1.msra.mxu0 0.0
        %262 = vmatprep.subr.mxu0 0.0
        %263 = vmatpush1.msra.mxu0 0.0
        %264 = vmatprep.subr.mxu0 0.0
        %265 = vmatpush1.msra.mxu0 0.0
        %266 = vmatprep.subr.mxu0 0.0
        %267 = vmatpush1.msra.mxu0 0.0
        %268 = vmatprep.subr.mxu0 0.0
        %269 = vmatpush1.msra.mxu0 0.0
        %270 = vmatprep.subr.mxu0 0.0
        %271 = vmatpush1.msra.mxu0 0.0
        %272 = vmatprep.subr.mxu0 0.0
        %273 = vmatpush1.msra.mxu0 0.0
        %274 = vmatprep.subr.mxu0 0.0
        %275 = vmatpush1.msra.mxu0 0.0
        %276 = vmatprep.subr.mxu0 0.0
        %277 = vmatpush1.msra.mxu0 0.0
        %278 = vmatprep.subr.mxu0 0.0
        %279 = vmatpush1.msra.mxu0 0.0
        %280 = vmatprep.subr.mxu0 0.0
        %281 = vmatpush1.msra.mxu0 0.0
        %282 = vmatprep.subr.mxu0 0.0
        %283 = vmatpush1.msra.mxu0 0.0
        %284 = vmatprep.subr.mxu0 0.0
        %285 = vmatpush1.msra.mxu0 0.0
        %286 = vmatprep.subr.mxu0 0.0
        %287 = vmatpush1.msra.mxu0 0.0
        %288 = vmatprep.subr.mxu0 0.0
        %289 = vmatpush1.msra.mxu0 0.0
        %290 = vmatprep.subr.mxu0 0.0
        %291 = vmatpush1.msra.mxu0 0.0
        %292 = vmatprep.subr.mxu0 0.0
        %293 = vmatpush1.msra.mxu0 0.0
        %294 = vmatprep.subr.mxu0 0.0
        %295 = vmatpush1.msra.mxu0 0.0
        %296 = vmatprep.subr.mxu0 0.0
        %297 = vmatpush1.msra.mxu0 0.0
        %298 = vmatprep.subr.mxu0 0.0
        %299 = vmatpush1.msra.mxu0 0.0
        %300 = vmatprep.subr.mxu0 0.0
        %301 = vmatpush1.msra.mxu0 0.0
        %302 = vmatprep.mubr.f32.mxu0 0.0
        %303 = vmatmul.mubr.f32.gmra.mrb[0].mxu0 %v232
        %v304 = vpop.f32.mrb[0].mxu0
        %v305 = vadd.f32 0.0, %v304
        %v306 = vpop.f32.mrb[0].mxu0
        %307 = vdwg.mxu0
        %vm308 = vcmp.ge.f32.partialorder %v305, 0.0
        %v309 = vmul.f32 %v305, 0.01
        %v310 = vsel %vm308, %v305, %v309
        %v311 = vmul.f32 %v305, %v305
        %313 = vrot.lane.b32.xlu0 %v311, 124
        %v314 = vpop.permute.xlu0 %313
        %v316 = vadd.f32 %v311, %v314
        %v317 = vrsqrt.pop %v316
        %v318 = vmul.f32 %v316, %v317
        %vm319 = vcmp.eq.f32.partialorder %v316, inf
        %v320 = vsel %vm319, %v316, %v318
        %vm321 = vcmp.eq.f32.partialorder %v316, 0.0
        %v322 = vand.u32 %v316, 2147483648
        %v323 = vsel %vm321, %v322, %v320
        %325 = vrot.lane.b32.xlu0 %v323, 8
        %v326 = vpop.permute.xlu0 %325
        %v328 = vmul.f32 %v310, %v326
        %v329 = vsub.f32 0.0, %v305
        %331 = vrot.lane.b32.xlu0 %v329, 8
        %v332 = vpop.permute.xlu0 %331
        %v334 = vmul.f32 %v310, %v332
        %v335 = vand.u32 2147483647, %v334
        %vm336 = vcmp.le.f32.partialorder %v335, 0.7853982
        %vm337 = vcmp.lt.s32.totalorder %v334, 0
        %v338 = vand.u32 %v334, 2139095040
        %v339 = vshrl.u32 %v338, 23
        %v340 = vsub.s32 %v339, 127
        %v341 = vand.u32 2147483647, %v334
        %v342 = vand.u32 %v341, 8388607
        %v343 = vor.u32 %v342, 8388608
        %v344 = vsub.s32 0, %v343
        %v345 = vadd.s32 %v340, 1
        %vm346 = vcmp.gt.s32.totalorder %v345, 0
        %v347 = vsel %vm346, %v345, 0
        %v348 = vshrl.u32 %v347, 5
        %v349 = vand.u32 %v347, 31
        %v350 = vsub.s32 32, %v349
        %v351 = vshrl.u32 683565275, %v350
        %v352 = vshll.u32 683565275, %v349
        %v353 = vshrl.u32 2475754826, %v350
        %v354 = vor.u32 %v352, %v353
        %v355 = vshll.u32 2475754826, %v349
        %v356 = vshrl.u32 2131351028, %v350
        %v357 = vor.u32 %v355, %v356
        %v358 = vshll.u32 2131351028, %v349
        %v359 = vshrl.u32 2102212464, %v350
        %v360 = vor.u32 %v358, %v359
        %v361 = vshll.u32 2102212464, %v349
        %v362 = vshrl.u32 920167782, %v350
        %v363 = vor.u32 %v361, %v362
        %v364 = vshll.u32 920167782, %v349
        %v365 = vshrl.u32 1326507024, %v350
        %v366 = vor.u32 %v364, %v365
        %vm367 = vcmp.lt.s32.totalorder %v348, 1
        %vm368 = vcmp.lt.s32.totalorder %v348, 2
        %vm369 = vcmp.lt.s32.totalorder %v348, 3
        %vm370 = vcmp.lt.s32.totalorder %v348, 4
        %v371 = vsel %vm367, %v351, %v354
        %v372 = vsel %vm370, %v360, 2102212464
        %v373 = vsel %vm369, %v357, %v372
        %v374 = vsel %vm368, %v371, %v373
        %v375 = vsel %vm367, %v354, %v357
        %v376 = vsel %vm370, %v363, 920167782
        %v377 = vsel %vm369, %v360, %v376
        %v378 = vsel %vm368, %v375, %v377
        %v379 = vsel %vm367, %v357, %v360
        %v380 = vsel %vm370, %v366, 1326507024
        %v381 = vsel %vm369, %v363, %v380
        %v382 = vsel %vm368, %v379, %v381
        %v383 = vshll.u32 %v343, 8
        %v384 = vmul.u32.u64.compose %v383, %v382
        %v385 = vextract.low.u32 %v384
        %v386 = vextract.high.u32 %v384
        %v387 = vmul.u32.u64.compose %v383, %v378
        %v388 = vextract.low.u32 %v387
        %v389 = vextract.high.u32 %v387
        %v390 = vmul.u32 %v383, %v374
        %v391 = vadd.s32 %v386, %v388
        %vm392 = vc.u32 %v386, %v388
        %v393 = vadd.s32 %v389, 1
        %v394 = vsel %vm392, %v393, %v389
        %v395 = vadd.s32 %v390, %v394
        %v396 = vadd.s32 %v395, 536870912
        %v397 = vshrl.u32 %v396, 30
        %v398 = vshll.u32 %v397, 30
        %v399 = vsub.s32 %v395, %v398
        %vm400 = vcmp.lt.s32.totalorder %v399, 0
        %v401 = vsub.s32 0, %v399
        %v402 = vsel %vm400, %v401, %v399
        %v403 = vclz %v402
        %v404 = vsub.s32 %v403, 2
        %vm405 = vcmp.gt.s32.totalorder 0, %v404
        %v406 = vsel %vm405, 0, %v404
        %v407 = vsub.s32 32, %v406
        %v408 = vshll.u32 %v399, %v406
        %v409 = vshrl.u32 %v391, %v407
        %v410 = vor.u32 %v408, %v409
        %v411 = vsub.s32 4294967266, %v406
        %v412 = vadd.s32 %v411, 127
        %v413 = vshll.u32 %v412, 23
        %v414 = vor.u32 4788187, %v413
        %v415 = vand.u32 2147483647, %v414
        %v417 = vcvt.s32.f32 %v410
        %v418 = vmul.f32 %v417, %v415
        %v419 = vxor.u32 %v418, 2147483648
        %v420 = vsel %vm337, %v419, %v418
        %v421 = vsub.s32 4, %v397
        %v422 = vsel %vm337, %v421, %v397
        %v423 = vsel %vm336, %v334, %v420
        %v424 = vsel %vm336, 0, %v422
        %v425 = vcosq.f32.pop %v423
        %v426 = vsinq.f32.pop %v423
        %vm427 = vweird.f32 %v334
        %v428 = vand.u32 %v424, 3
        %vm429 = vcmp.lt.s32.totalorder %v428, 2
        %vm430 = vcmp.eq.s32.totalorder %v428, 0
        %v431 = vxor.u32 %v426, 2147483648
        %v432 = vsel %vm430, %v425, %v431
        %vm433 = vcmp.eq.s32.totalorder %v428, 2
        %v434 = vxor.u32 %v425, 2147483648
        %v435 = vsel %vm433, %v434, %v426
        %v436 = vsel %vm429, %v432, %v435
        %v437 = vsel %vm427, nan, %v436
        %439 = vrot.lane.b32.xlu0 %v437, 124
        %v440 = vpop.permute.xlu0 %439
        %v442 = vmul.f32 %v328, %v440
        %v443 = vand.u32 2147483647, %v334
        %vm444 = vcmp.le.f32.partialorder %v443, 0.7853982
        %vm445 = vcmp.lt.s32.totalorder %v334, 0
        %v446 = vand.u32 %v334, 2139095040
        %v447 = vshrl.u32 %v446, 23
        %v448 = vsub.s32 %v447, 127
        %v449 = vand.u32 2147483647, %v334
        %v450 = vand.u32 %v449, 8388607
        %v451 = vor.u32 %v450, 8388608
        %v452 = vsub.s32 0, %v451
        %v453 = vadd.s32 %v448, 1
        %vm454 = vcmp.gt.s32.totalorder %v453, 0
        %v455 = vsel %vm454, %v453, 0
        %v456 = vshrl.u32 %v455, 5
        %v457 = vand.u32 %v455, 31
        %v458 = vsub.s32 32, %v457
        %v459 = vshrl.u32 683565275, %v458
        %v460 = vshll.u32 683565275, %v457
        %v461 = vshrl.u32 2475754826, %v458
        %v462 = vor.u32 %v460, %v461
        %v463 = vshll.u32 2475754826, %v457
        %v464 = vshrl.u32 2131351028, %v458
        %v465 = vor.u32 %v463, %v464
        %v466 = vshll.u32 2131351028, %v457
        %v467 = vshrl.u32 2102212464, %v458
        %v468 = vor.u32 %v466, %v467
        %v469 = vshll.u32 2102212464, %v457
        %v470 = vshrl.u32 920167782, %v458
        %v471 = vor.u32 %v469, %v470
        %v472 = vshll.u32 920167782, %v457
        %v473 = vshrl.u32 1326507024, %v458
        %v474 = vor.u32 %v472, %v473
        %vm475 = vcmp.lt.s32.totalorder %v456, 1
        %vm476 = vcmp.lt.s32.totalorder %v456, 2
        %vm477 = vcmp.lt.s32.totalorder %v456, 3
        %vm478 = vcmp.lt.s32.totalorder %v456, 4
        %v479 = vsel %vm475, %v459, %v462
        %v480 = vsel %vm478, %v468, 2102212464
        %v481 = vsel %vm477, %v465, %v480
        %v482 = vsel %vm476, %v479, %v481
        %v483 = vsel %vm475, %v462, %v465
        %v484 = vsel %vm478, %v471, 920167782
        %v485 = vsel %vm477, %v468, %v484
        %v486 = vsel %vm476, %v483, %v485
        %v487 = vsel %vm475, %v465, %v468
        %v488 = vsel %vm478, %v474, 1326507024
        %v489 = vsel %vm477, %v471, %v488
        %v490 = vsel %vm476, %v487, %v489
        %v491 = vshll.u32 %v451, 8
        %v492 = vmul.u32.u64.compose %v491, %v490
        %v493 = vextract.low.u32 %v492
        %v494 = vextract.high.u32 %v492
        %v495 = vmul.u32.u64.compose %v491, %v486
        %v496 = vextract.low.u32 %v495
        %v497 = vextract.high.u32 %v495
        %v498 = vmul.u32 %v491, %v482
        %v499 = vadd.s32 %v494, %v496
        %vm500 = vc.u32 %v494, %v496
        %v501 = vadd.s32 %v497, 1
        %v502 = vsel %vm500, %v501, %v497
        %v503 = vadd.s32 %v498, %v502
        %v504 = vadd.s32 %v503, 536870912
        %v505 = vshrl.u32 %v504, 30
        %v506 = vshll.u32 %v505, 30
        %v507 = vsub.s32 %v503, %v506
        %vm508 = vcmp.lt.s32.totalorder %v507, 0
        %v509 = vsub.s32 0, %v507
        %v510 = vsel %vm508, %v509, %v507
        %v511 = vclz %v510
        %v512 = vsub.s32 %v511, 2
        %vm513 = vcmp.gt.s32.totalorder 0, %v512
        %v514 = vsel %vm513, 0, %v512
        %v515 = vsub.s32 32, %v514
        %v516 = vshll.u32 %v507, %v514
        %v517 = vshrl.u32 %v499, %v515
        %v518 = vor.u32 %v516, %v517
        %v519 = vsub.s32 4294967266, %v514
        %v520 = vadd.s32 %v519, 127
        %v521 = vshll.u32 %v520, 23
        %v522 = vor.u32 4788187, %v521
        %v523 = vand.u32 2147483647, %v522
        %v525 = vcvt.s32.f32 %v518
        %v526 = vmul.f32 %v525, %v523
        %v527 = vxor.u32 %v526, 2147483648
        %v528 = vsel %vm445, %v527, %v526
        %v529 = vsub.s32 4, %v505
        %v530 = vsel %vm445, %v529, %v505
        %v531 = vsel %vm444, %v334, %v528
        %v532 = vsel %vm444, 0, %v530
        %v533 = vcosq.f32.pop %v531
        %v534 = vsinq.f32.pop %v531
        %vm535 = vweird.f32 %v334
        %v536 = vadd.s32 %v532, 3
        %v537 = vand.u32 %v536, 3
        %vm538 = vcmp.lt.s32.totalorder %v537, 2
        %vm539 = vcmp.eq.s32.totalorder %v537, 0
        %v540 = vxor.u32 %v534, 2147483648
        %v541 = vsel %vm539, %v533, %v540
        %vm542 = vcmp.eq.s32.totalorder %v537, 2
        %v543 = vxor.u32 %v533, 2147483648
        %v544 = vsel %vm542, %v543, %v534
        %v545 = vsel %vm538, %v541, %v544
        %v546 = vsel %vm535, nan, %v545
        %548 = vrot.lane.b32.xlu0 %v546, 124
        %v549 = vpop.permute.xlu0 %548
        %v551 = vmul.f32 %v328, %v549
        %553 = vrot.lane.b32.xlu0 %v442, 120
        %v554 = vpop.permute.xlu0 %553
        %557 = vrot.lane.b32.xlu0 %v551, 124
        %v558 = vpop.permute.xlu0 %557
        %vm560 = vcmask 31744
        %v561 = vsel %vm560, %v554, %v558
        %v562 = vld [vmem:[#allocation7] sm:$0xff]
        %v564 = vsel %vm226, %v561, 0
        %566 = vmatprep.subr.mxu0 0.0
        %567 = vmatpush1.msra.mxu0 %v562
        %568 = vmatprep.subr.mxu0 0.0
        %569 = vmatpush1.msra.mxu0 0.0
        %570 = vmatprep.subr.mxu0 0.0
        %571 = vmatpush1.msra.mxu0 0.0
        %572 = vmatprep.subr.mxu0 0.0
        %573 = vmatpush1.msra.mxu0 0.0
        %574 = vmatprep.subr.mxu0 0.0
        %575 = vmatpush1.msra.mxu0 0.0
        %576 = vmatprep.subr.mxu0 0.0
        %577 = vmatpush1.msra.mxu0 0.0
        %578 = vmatprep.subr.mxu0 0.0
        %579 = vmatpush1.msra.mxu0 0.0
        %580 = vmatprep.subr.mxu0 0.0
        %581 = vmatpush1.msra.mxu0 0.0
        %582 = vmatprep.subr.mxu0 0.0
        %583 = vmatpush1.msra.mxu0 0.0
        %584 = vmatprep.subr.mxu0 0.0
        %585 = vmatpush1.msra.mxu0 0.0
        %586 = vmatprep.subr.mxu0 0.0
        %587 = vmatpush1.msra.mxu0 0.0
        %588 = vmatprep.subr.mxu0 0.0
        %589 = vmatpush1.msra.mxu0 0.0
        %590 = vmatprep.subr.mxu0 0.0
        %591 = vmatpush1.msra.mxu0 0.0
        %592 = vmatprep.subr.mxu0 0.0
        %593 = vmatpush1.msra.mxu0 0.0
        %594 = vmatprep.subr.mxu0 0.0
        %595 = vmatpush1.msra.mxu0 0.0
        %596 = vmatprep.subr.mxu0 0.0
        %597 = vmatpush1.msra.mxu0 0.0
        %598 = vmatprep.subr.mxu0 0.0
        %599 = vmatpush1.msra.mxu0 0.0
        %600 = vmatprep.subr.mxu0 0.0
        %601 = vmatpush1.msra.mxu0 0.0
        %602 = vmatprep.subr.mxu0 0.0
        %603 = vmatpush1.msra.mxu0 0.0
        %604 = vmatprep.subr.mxu0 0.0
        %605 = vmatpush1.msra.mxu0 0.0
        %606 = vmatprep.subr.mxu0 0.0
        %607 = vmatpush1.msra.mxu0 0.0
        %608 = vmatprep.subr.mxu0 0.0
        %609 = vmatpush1.msra.mxu0 0.0
        %610 = vmatprep.subr.mxu0 0.0
        %611 = vmatpush1.msra.mxu0 0.0
        %612 = vmatprep.subr.mxu0 0.0
        %613 = vmatpush1.msra.mxu0 0.0
        %614 = vmatprep.subr.mxu0 0.0
        %615 = vmatpush1.msra.mxu0 0.0
        %616 = vmatprep.subr.mxu0 0.0
        %617 = vmatpush1.msra.mxu0 0.0
        %618 = vmatprep.subr.mxu0 0.0
        %619 = vmatpush1.msra.mxu0 0.0
        %620 = vmatprep.subr.mxu0 0.0
        %621 = vmatpush1.msra.mxu0 0.0
        %622 = vmatprep.subr.mxu0 0.0
        %623 = vmatpush1.msra.mxu0 0.0
        %624 = vmatprep.subr.mxu0 0.0
        %625 = vmatpush1.msra.mxu0 0.0
        %626 = vmatprep.subr.mxu0 0.0
        %627 = vmatpush1.msra.mxu0 0.0
        %628 = vmatprep.subr.mxu0 0.0
        %629 = vmatpush1.msra.mxu0 0.0
        %630 = vmatprep.mubr.f32.mxu0 0.0
        %631 = vmatmul.mubr.f32.gmra.mrb[0].mxu0 %v564
        %v632 = vpop.f32.mrb[0].mxu0
        %v633 = vadd.f32 0.0, %v632
        %v634 = vpop.f32.mrb[0].mxu0
        %635 = vdwg.mxu0
        %v636 = vlaneseq
        %v637 = vshrl.u32 %v636, 7
        %v638 = vsub.s32 0, %v637
        %v639 = vrot.slane %v633, %v638
        %641 = vbcast.lane.b32.xlu0 %v639, 256
        %v642 = vpop.permute.xlu0 %641
        %v643 = vadd.f32 %v213, %v642
        %644 = vst [vmem:[%s212] sm:$0xff] %v643
        %s645 = sand.u32 %s97, 1
        %s646 = scalar_lea.sflag [#allocation4], %s645
        %s647 = sand.u32 %s97, 1
        %s648 = smul.addr %s647, 8
        %s649 = scalar_lea.vmem [#allocation8], %s648
        // Predicated region
        $region45: #{tpu_custom_call.1} parent=31 // pred_check
          %p650 = pneg %p107
        $region46: #{tpu_custom_call.1} parent=31 // pred_check_branch
          %652 = sbr.rel (%p650) target = $region48
        $region47: #{tpu_custom_call.1} parent=31 // pred_region
          %s654 = ssub.s32 128, 128
          %655 = vsyncadd %s646, %s654
          %s656 = smul.addr %s21, 128
          %s657 = scalar_lea.hbm %s3, %s656
          %s659 = sshll.u32 %s649, 4
          %s660 = int_to_ptr.vmem [resolvable:$true] %s659
          %662 = dma.vmem_to_hbm [thread:$0]  %s660, 128, %s657, %s646
        $region48: #{tpu_custom_call.1} parent=31 // pred_fallthru
          _
      $region32: #{tpu_custom_call.1} parent=5 // pred_fallthru
        _
      %p663 = scmp.le.s32.totalorder 2, %s16
      // Predicated region
      $region49: #{tpu_custom_call.1} parent=5 // pred_check
        %p664 = pneg %p663
      $region50: #{tpu_custom_call.1} parent=5 // pred_check_branch
        %666 = sbr.rel (%p664) target = $region52
      $region51: #{tpu_custom_call.1} parent=5 // pred_region
        %s667 = ssub.s32 %s16, 2
        // Predicated region
        $region53: #{tpu_custom_call.1} parent=51 // pred_check
          %p668 = pneg %p113
        $region54: #{tpu_custom_call.1} parent=51 // pred_check_branch
          %670 = sbr.rel (%p668) target = $region56
        $region55: #{tpu_custom_call.1} parent=51 // pred_region
          %s671 = sand.u32 %s98, 1
          %s672 = scalar_lea.sflag [#allocation4], %s671
          %s673 = sand.u32 %s98, 1
          %s674 = smul.addr %s673, 8
          %s675 = scalar_lea.vmem [#allocation8], %s674
          %676 = dma.done %s672, 128
        $region56: #{tpu_custom_call.1} parent=51 // pred_fallthru
          _
      $region52: #{tpu_custom_call.1} parent=5 // pred_fallthru
        _
    $region6: #{tpu_custom_call.1} parent=1 // loop_footer
      %s20 = sadd.s32 1, %s16
    $region7: #{tpu_custom_call.1} parent=1 // loop_footer_branch
      %15 = sbr.rel target = $region3
    $region8: #{tpu_custom_call.1} parent=1 // loop_exit
      _
    %677 = vsyncpa [#allocation3], 1
    %s678 = scalar_lea.sflag [#allocation3], 1
    %679 = vsyncpa %s678, 1
    %680 = vsyncpa [#allocation6], 1
    %681 = vsyncpa [#allocation4], 1
    %s682 = scalar_lea.sflag [#allocation4], 1
    %683 = vsyncpa %s682, 1

</llo_original>
